<compile_context>
chip_gen: v7x
topology: tpu7x:2x2x1
jax: 0.10.0
libtpu: 0.0.40
codegen_flags: <defaults>
</compile_context>

<pallas_src>
import math

import numpy as np
import jax
import jax.numpy as jnp
from jax.experimental import pallas as pl
from jax.experimental.pallas import tpu as pltpu

_LANE = 128
_MAX_LANE_TILE = 2048                   # lane-tile cap (multiple of 128)
_MAX_BLOCK_BYTES = 6 * 1024 * 1024      # ~6 MiB per block per buffer
_VMEM_LIMIT_BYTES = 48 * 1024 * 1024    # explicit scoped-VMEM limit (v7x-safe)
_MULTIBLOCK_MIN_BYTES = 512 * 1024      # below this, a single block is fine


def _delta_depth_kernel(depth_ref, delta_ref, out_ref):
    # (tb, tn) + (tb, 1) lane-broadcast add; pure VPU, HBM-bandwidth bound.
    out_ref[...] = (depth_ref[...] + delta_ref[...]).astype(out_ref.dtype)


def _delta_depth_dense_kernel(depth_ref, delta_ref, expand_ref, out_ref):
    # delta (tb, G) @ expand (G, tn) -> per-lane delta (tb, tn).  The MXU is
    # idle in this mem-bound kernel, so the expansion is effectively free and
    # keeps the output stores lane-dense for small native N.
    d = jnp.dot(delta_ref[...], expand_ref[...],
                preferred_element_type=jnp.float32)
    out_ref[...] = (depth_ref[...].astype(jnp.float32) + d).astype(out_ref.dtype)


def _sublane_multiple(itemsize):
    # dtype-native sublane packing: 8 rows f32, 16 bf16, 32 int8/fp8.
    return 8 * max(1, 4 // max(1, itemsize))


def _choose_tiles(B, N, itemsize):
    """Pick (tb, tn) satisfying the (8,128)-or-full-dim rule under ~6 MiB/block."""
    sub = _sublane_multiple(itemsize)
    tn = N if N <= _MAX_LANE_TILE else _MAX_LANE_TILE
    # Row budget.  The narrow delta block pads to 128 lanes in VMEM, so charge
    # it against the per-block budget as well (keeps larger-block math honest).
    max_rows = max(sub, _MAX_BLOCK_BYTES // max(1, (tn + _LANE) * itemsize))
    tb = B if B <= max_rows else (max_rows // sub) * sub
    return tb, tn, sub


def _ensure_multi_block(B, N, tb, tn, sub, itemsize):
    """Guarantee >=2 grid blocks on non-tiny arrays (v7x megacore occupancy +
    gives the auto-pipeline something to overlap)."""
    if B * N * itemsize < _MULTIBLOCK_MIN_BYTES:
        return tb, tn
    if pl.cdiv(B, tb) * pl.cdiv(N, tn) >= 2:
        return tb, tn
    if B >= 2 * sub:                       # prefer batch axis: stores stay lane-dense
        half = -(-((B + 1) // 2) // sub) * sub
        return half, tn
    if N >= 2 * _LANE:
        half = -(-((N + 1) // 2) // _LANE) * _LANE
        return tb, half
    return tb, tn


def delta_depth(depth: jax.Array, delta_d: jax.Array, *,
                tb=None, tn=None, donate_depth: bool = False) -> jax.Array:
    """depth: (B, N), delta_d: (B, 1) -> (B, N) = depth + delta_d (broadcast).

    Set donate_depth=True only when the caller donates `depth` (e.g. via jit
    donate_argnums); otherwise XLA inserts a defensive copy of the buffer.
    """
    B, N = depth.shape
    assert delta_d.shape == (B, 1), (delta_d.shape, (B, 1))

    # Match PyTorch type promotion (bf16 depth + f32 delta -> f32 result).
    out_dtype = jnp.result_type(depth.dtype, delta_d.dtype)
    depth = depth.astype(out_dtype)
    delta_d = delta_d.astype(out_dtype)
    itemsize = jnp.dtype(out_dtype).itemsize

    # ---- lane densification for small native N ------------------------------
    G = 1
    if N < _LANE and jnp.issubdtype(out_dtype, jnp.floating):
        g = _LANE // math.gcd(N, _LANE)
        if B % g == 0 and g * N <= _MAX_LANE_TILE:
            G = g

    if G > 1:
        Bg, L = B // G, G * N
        depth2d = depth.reshape(Bg, L)          # free: row-major contiguous
        delta2d = delta_d.reshape(Bg, G)        # free
        lane_group = np.arange(L) // N
        expand = jnp.asarray(
            (lane_group[None, :] == np.arange(G)[:, None]), dtype=out_dtype)
    else:
        Bg, L = B, N
        depth2d, delta2d, expand = depth, delta_d, None

    # ---- tile selection ------------------------------------------------------
    auto_tb, auto_tn, sub = _choose_tiles(Bg, L, itemsize)
    if tb is None and tn is None:
        auto_tb, auto_tn = _ensure_multi_block(Bg, L, auto_tb, auto_tn, sub, itemsize)
    tbb = auto_tb if tb is None else tb
    tnn = auto_tn if tn is None else tn
    # (8,128) rule: block dims must be multiples of (8,128) or equal full dims.
    assert tbb == Bg or tbb % 8 == 0, (tbb, Bg)
    assert tnn == L or tnn % _LANE == 0, (tnn, L)

    grid = (pl.cdiv(Bg, tbb), pl.cdiv(L, tnn))

    cost = pl.CostEstimate(
        flops=2 * B * N,
        transcendentals=0,
        bytes_accessed=(2 * B * N + B) * itemsize,
    )

    if G > 1:
        kernel = _delta_depth_dense_kernel
        operands = (depth2d, delta2d, expand)
        in_specs = [
            pl.BlockSpec((tbb, tnn), lambda i, j: (i, j)),
            pl.BlockSpec((tbb, G), lambda i, j: (i, 0)),
            pl.BlockSpec((G, tnn), lambda i, j: (0, j)),
        ]
    else:
        kernel = _delta_depth_kernel
        operands = (depth2d, delta2d)
        in_specs = [
            pl.BlockSpec((tbb, tnn), lambda i, j: (i, j)),
            pl.BlockSpec((tbb, 1), lambda i, j: (i, 0)),
        ]

    out = pl.pallas_call(
        kernel,
        out_shape=jax.ShapeDtypeStruct((Bg, L), out_dtype),
        grid_spec=pltpu.PrefetchScalarGridSpec(
            num_scalar_prefetch=0,
            grid=grid,
            in_specs=in_specs,
            out_specs=pl.BlockSpec((tbb, tnn), lambda i, j: (i, j)),
        ),
        compiler_params=pltpu.CompilerParams(
            dimension_semantics=("parallel", "parallel"),
            vmem_limit_bytes=_VMEM_LIMIT_BYTES,
        ),
        input_output_aliases={0: 0} if donate_depth else {},
        cost_estimate=cost,
    )(*operands)

    return out.reshape(B, N)


if __name__ == "__main__":
    key = jax.random.PRNGKey(0)
    k1, k2, k3, k4, k5, k6, k7, k8 = jax.random.split(key, 8)

    # Case 1: module-native tiny shapes (single full block, regular path).
    bs, n = 2, 16
    depth = jax.random.normal(k1, (bs, n), dtype=jnp.float32)
    delta_d = jax.random.normal(k2, (bs, 1), dtype=jnp.float32)
    ref = depth + delta_d
    out = jax.block_until_ready(delta_depth(depth, delta_d))
    assert out.shape == (bs, n)
    assert jnp.allclose(out, ref, atol=1e-6, rtol=1e-6)

    # Case 2: lane-densified path for small N (N=16 -> G=8, lanes become 128).
    bs2, n2 = 64, 16
    depth2 = jax.random.normal(k3, (bs2, n2), dtype=jnp.float32)
    delta2 = jax.random.normal(k4, (bs2, 1), dtype=jnp.float32)
    ref2 = depth2 + delta2
    out2 = jax.block_until_ready(delta_depth(depth2, delta2))
    assert out2.shape == (bs2, n2)
    assert jnp.allclose(out2, ref2, atol=1e-6, rtol=1e-6)

    # Case 3: explicit multi-tile grid with partial edge blocks + aliased output.
    bs3, n3 = 200, 384
    depth3 = jax.random.normal(k5, (bs3, n3), dtype=jnp.float32)
    delta3 = jax.random.normal(k6, (bs3, 1), dtype=jnp.float32)
    ref3 = depth3 + delta3
    out3 = jax.block_until_ready(
        delta_depth(depth3, delta3, tb=128, tn=256, donate_depth=True))
    assert out3.shape == (bs3, n3)
    assert jnp.allclose(out3, ref3, atol=1e-6, rtol=1e-6)

    # Case 4: auto path on a larger array — exercises the >=2-block split.
    bs4, n4 = 512, 384
    depth4 = jax.random.normal(k7, (bs4, n4), dtype=jnp.float32)
    delta4 = jax.random.normal(k8, (bs4, 1), dtype=jnp.float32)
    ref4 = depth4 + delta4
    out4 = jax.block_until_ready(delta_depth(depth4, delta4))
    assert out4.shape == (bs4, n4)
    assert jnp.allclose(out4, ref4, atol=1e-6, rtol=1e-6)

    print("KERNEL_OK")
</pallas_src>

<mosaic_0001>
module attributes {stable_mosaic.version = 11 : i64} {
  func.func @_delta_depth_kernel(%arg0: i32, %arg1: i32, %arg2: memref<2x16xf32, #tpu.memory_space<vmem>>, %arg3: memref<2x1xf32, #tpu.memory_space<vmem>>, %arg4: memref<2x16xf32, #tpu.memory_space<vmem>>) attributes {dimension_semantics = [#tpu.dimension_semantics<parallel>, #tpu.dimension_semantics<parallel>], iteration_bounds = array<i64: 1, 1>, scalar_prefetch = 0 : i64, scratch_operands = 0 : i64, tpu.core_type = #tpu.core_type<tc>, window_params = [{transform_indices = @transform_0, window_bounds = array<i64: 2, 16>}, {transform_indices = @transform_1, window_bounds = array<i64: 2, 1>}, {transform_indices = @transform_2, window_bounds = array<i64: 2, 16>}]} {
    %c0 = arith.constant 0 : index
    %c0_0 = arith.constant 0 : index
    %0 = vector.load %arg2[%c0, %c0_0] : memref<2x16xf32, #tpu.memory_space<vmem>>, vector<2x16xf32>
    %c0_1 = arith.constant 0 : index
    %c0_2 = arith.constant 0 : index
    %1 = vector.load %arg3[%c0_1, %c0_2] : memref<2x1xf32, #tpu.memory_space<vmem>>, vector<2x1xf32>
    %2 = vector.broadcast %1 : vector<2x1xf32> to vector<2x16xf32>
    %3 = arith.addf %0, %2 : vector<2x16xf32>
    %c0_3 = arith.constant 0 : index
    %c0_4 = arith.constant 0 : index
    %4 = vector.load %arg4[%c0_3, %c0_4] : memref<2x16xf32, #tpu.memory_space<vmem>>, vector<2x16xf32>
    tpu.vector_store %arg4[%c0_3, %c0_4], %3 {strides = array<i32>} : memref<2x16xf32, #tpu.memory_space<vmem>>, vector<2x16xf32>,
    return
  }
  func.func @transform_0(%arg0: i32, %arg1: i32) -> (i32, i32) {
    %c0_i32 = arith.constant 0 : i32
    return %arg0, %arg1 : i32, i32
  }
  func.func @transform_1(%arg0: i32, %arg1: i32) -> (i32, i32) {
    %c0_i32 = arith.constant 0 : i32
    %c0_i32_0 = arith.constant 0 : i32
    return %arg0, %c0_i32 : i32, i32
  }
  func.func @transform_2(%arg0: i32, %arg1: i32) -> (i32, i32) {
    %c0_i32 = arith.constant 0 : i32
    return %arg0, %arg1 : i32, i32
  }
}

</mosaic_0001>

<llo_original>
// kernel: tpu_custom_call.1
$region0: #{tpu_custom_call.1}
  #allocation0 [shape = 'u32[]', space=smem, size = 0x4, offset = 0x4, fixed_abs, tag = 'smem constant byte address 0x4 - core index']
  #allocation1 [shape = 'u32[144,128]{1,0:T(1,128)}', space=vmem, size = 0x12000, scoped, tag = 'internal scratch']
  %s0 = inlined_call_operand.vmem [shape: f32[2,16], index: 0, kind: input, shape index: {}]
  %s1 = inlined_call_operand.vmem [shape: f32[2,1], index: 1, kind: input, shape index: {}]
  %s2 = inlined_call_operand.hbm [shape: f32[2,16], index: 2, kind: output, shape index: {}]
  %s3 = sld [smem:[#allocation0]]
  $region18: #{tpu_custom_call.1} parent=0
    _
  %s5 = ssub.s32 1, %s3
  %s6 = scalar_select 0, %s5, %s3
  $region1: #{tpu_custom_call.1} parent=0
    #allocation2 [shape = 'u8[1024]{0}', space=vmem, size = 0x400, scoped, tag = 'output window, operand 0, single buffered']
    #allocation3 [shape = 's32[1]{0}', space=sflag, size = 0x4, scoped, tag = 'scoped memory for tpu_custom_call.1']
    %7 = vsyncpa [#allocation3], 0
    // Predicated region
    $region2: #{tpu_custom_call.1} parent=1 // pred_check
      _
    $region3: #{tpu_custom_call.1} parent=1 // pred_check_branch
      %9 = sbr.rel (0) target = $region5
    $region4: #{tpu_custom_call.1} parent=1 // pred_region
      _
    $region5: #{tpu_custom_call.1} parent=1 // pred_fallthru
      _
    // Predicated region
    $region6: #{tpu_custom_call.1} parent=1 // pred_check
      _
    $region7: #{tpu_custom_call.1} parent=1 // pred_check_branch
      %11 = sbr.rel (0) target = $region9
    $region8: #{tpu_custom_call.1} parent=1 // pred_region
      _
    $region9: #{tpu_custom_call.1} parent=1 // pred_fallthru
      _
    %v12 = vld [vmem:[%s0] sm:$0x3]
    %v13 = vld [vmem:[%s1] sm:$0x3]
    %15 = vset.pattern.permute.xlu0 0
    %16 = vperm.xlu0 %15, %v13
    %v17 = vpop.permute.xlu0 %16
    %v19 = vadd.f32 %v12, %v17
    %vm20 = vcmask 123904
    %21 = vst.msk [vmem:[#allocation2] sm:$0x3] %vm20, %v19
    // Predicated region
    $region10: #{tpu_custom_call.1} parent=1 // pred_check
      _
    $region11: #{tpu_custom_call.1} parent=1 // pred_check_branch
      %23 = sbr.rel (0) target = $region13
    $region12: #{tpu_custom_call.1} parent=1 // pred_region
      %s25 = ssub.s32 32, 32
      %26 = vsyncadd [#allocation3], %s25
      %s28 = sshll.u32 [#allocation2], 4
      %s29 = int_to_ptr.vmem [resolvable:$true] %s28
      %31 = dma.vmem_to_hbm [thread:$0]  %s29, 32, %s2, [#allocation3]
    $region13: #{tpu_custom_call.1} parent=1 // pred_fallthru
      _
    // Predicated region
    $region14: #{tpu_custom_call.1} parent=1 // pred_check
      _
    $region15: #{tpu_custom_call.1} parent=1 // pred_check_branch
      %33 = sbr.rel (0) target = $region17
    $region16: #{tpu_custom_call.1} parent=1 // pred_region
      %34 = dma.done [#allocation3], 32
    $region17: #{tpu_custom_call.1} parent=1 // pred_fallthru
      _
    %35 = vsyncpa [#allocation3], 1

</llo_original>
